<compile_context>
chip_gen: v7x
topology: tpu7x:2x2x1
jax: 0.10.0
libtpu: 0.0.40
codegen_flags: <defaults>
</compile_context>

<pallas_src>
import functools

import jax
import jax.numpy as jnp
from jax import lax
from jax.experimental import pallas as pl
from jax.experimental.pallas import tpu as pltpu

LANE = 128            # TPU lane width: out-feature dim padded to a multiple of this
MAX_BATCH_TILE = 512  # sweet spot from measured mem-bound tiling data (128->29%, 512->85% of roofline)
MXU_M = 256           # v6e/v7x MXU M granularity (also a 128-multiple for v5e)


# ----------------------------------------------------------------------------
# One-time (init-side) parameter preparation — NOT in the per-forward path.
# ----------------------------------------------------------------------------
def prepare_params(weight, bias):
    """Pad the out-feature dim of a PyTorch-layout [out, in] weight (and bias)
    to a multiple of 128 so kernel stores are lane-dense. Done once at init."""
    n_out, n_in = weight.shape
    n_out_p = pl.cdiv(n_out, LANE) * LANE
    if n_out_p != n_out:
        weight_p = jnp.zeros((n_out_p, n_in), weight.dtype).at[:n_out, :].set(weight)
        bias_p = jnp.zeros((n_out_p,), bias.dtype).at[:n_out].set(bias)
    else:
        weight_p, bias_p = weight, bias
    return weight_p, bias_p.reshape(1, n_out_p), n_out


def _pick_batch_tile(B):
    """Batch-tile policy:
       - small B: one full-extent tile (splitting is pure per-step overhead)
       - large B: >=2 tiles, aligned to 256 rows (MXU M on v6e/v7x), <=512."""
    if B < 2 * MXU_M:
        return B
    tb = min(MAX_BATCH_TILE, pl.cdiv(B, 2))
    return max(MXU_M, (tb // MXU_M) * MXU_M)


# ----------------------------------------------------------------------------
# Kernel
# ----------------------------------------------------------------------------
def _linear_kernel(x_ref, w_ref, b_ref, o_ref):
    # x_ref: [TB, n_in]       batch tile of sensors
    # w_ref: [n_out_p, n_in]  PyTorch [out, in] layout (no wrapper transpose)
    # b_ref: [1, n_out_p]     bias, lane-padded
    # o_ref: [TB, n_out_p]    lane-dense output tile
    x = x_ref[...]
    w = w_ref[...]
    # Contract x's feature dim (axis 1) with w's `in` dim (axis 1): x @ W.T on the MXU,
    # accumulated in f32.
    acc = lax.dot_general(
        x, w,
        dimension_numbers=(((1,), (1,)), ((), ())),
        preferred_element_type=jnp.float32,
    )
    # f32 epilogue (bias add) with a single cast at the store — correct on v5e too.
    o_ref[...] = (acc + b_ref[...]).astype(o_ref.dtype)


# ----------------------------------------------------------------------------
# Forward (jitted: padding-free hot path, single XLA program)
# ----------------------------------------------------------------------------
@functools.partial(jax.jit, static_argnames=("n_out", "return_padded"))
def simple_model_forward(sensors, weight_p, bias2d, n_out, return_padded=False):
    """sensors: [B, n_in]; weight_p: [n_out_p, n_in] (lane-padded PyTorch [out,in]);
    bias2d: [1, n_out_p]; n_out: true out width.
    Returns [B, n_out] (== sensors @ W.T + b), or [B, n_out_p] if return_padded."""
    B, n_in = sensors.shape
    n_out_p = weight_p.shape[0]

    TB = _pick_batch_tile(B)
    grid = (pl.cdiv(B, TB),)

    itemsize = jnp.dtype(sensors.dtype).itemsize
    cost = pl.CostEstimate(
        flops=2 * B * n_in * n_out_p,
        transcendentals=0,
        bytes_accessed=(B * n_in + n_out_p * n_in + n_out_p + B * n_out_p) * itemsize,
    )

    # Resident-weight VMEM guard (weight/bias are double-buffered by default,
    # x/out tiles too). Raise the scoped VMEM limit if we are near it.
    vmem_est = 2 * (n_out_p * n_in + TB * n_in + TB * n_out_p + n_out_p) * itemsize
    compiler_kwargs = dict(
        # batch tiles are independent -> v7x can split them across its 2 TCs
        dimension_semantics=("parallel",),
    )
    if vmem_est > (16 << 20):
        # TODO(synk): beyond ~half of v7x's scoped VMEM, switch to K/N grid tiling
        # ("arbitrary" reduction axis + f32 accumulator scratch) instead of only
        # raising the limit.
        compiler_kwargs["vmem_limit_bytes"] = int(min(max(vmem_est * 5 // 4, 32 << 20), 96 << 20))

    out_p = pl.pallas_call(
        _linear_kernel,
        out_shape=jax.ShapeDtypeStruct((B, n_out_p), sensors.dtype),
        grid=grid,
        in_specs=[
            pl.BlockSpec((TB, n_in), lambda i: (i, 0)),        # x: tiled over batch
            pl.BlockSpec((n_out_p, n_in), lambda i: (0, 0)),   # W: VMEM-resident
            pl.BlockSpec((1, n_out_p), lambda i: (0, 0)),      # b: VMEM-resident
        ],
        out_specs=pl.BlockSpec((TB, n_out_p), lambda i: (i, 0)),
        compiler_params=pltpu.CompilerParams(**compiler_kwargs),
        cost_estimate=cost,
    )(sensors, weight_p, bias2d)

    if return_padded or n_out == n_out_p:
        # No extra HBM round trip: padded columns are exactly zero anyway when
        # n_out == n_out_p this is already the exact result.
        return out_p if n_out == n_out_p else out_p
    # Drop padded columns (only taken when n_out is not a lane multiple).
    return out_p[:, :n_out]


if __name__ == "__main__":
    # Small shapes consistent with the module's forward: (n_batch, n_sensors)
    n_batch = 8
    n_sensors = 32
    n_encoded = 16  # present in __init__ but unused by the forward pass

    key = jax.random.PRNGKey(0)
    kx, kw, kb = jax.random.split(key, 3)

    sensors = jax.random.normal(kx, (n_batch, n_sensors), dtype=jnp.float32)
    # Deterministic param init mimicking nn.Linear's uniform(-1/sqrt(fan_in), 1/sqrt(fan_in))
    bound = 1.0 / jnp.sqrt(jnp.float32(n_sensors))
    weight = jax.random.uniform(kw, (n_sensors, n_sensors), jnp.float32, -bound, bound)
    bias = jax.random.uniform(kb, (n_sensors,), jnp.float32, -bound, bound)

    # One-time, init-side parameter prep (lane-padding) — not in the hot path.
    weight_p, bias2d, n_out = prepare_params(weight, bias)

    out = simple_model_forward(sensors, weight_p, bias2d, n_out=n_out)
    jax.block_until_ready(out)

    # Reference check against plain JAX (same semantics as torch.nn.Linear)
    ref = sensors @ weight.T + bias
    assert out.shape == (n_batch, n_sensors)
    assert jnp.allclose(out, ref, atol=1e-5, rtol=1e-5)

    print("KERNEL_OK")
</pallas_src>

<mosaic_0001>
module attributes {stable_mosaic.version = 11 : i64} {
  func.func @_linear_kernel(%arg0: i32, %arg1: memref<8x32xf32, #tpu.memory_space<vmem>>, %arg2: memref<128x32xf32, #tpu.memory_space<vmem>>, %arg3: memref<1x128xf32, #tpu.memory_space<vmem>>, %arg4: memref<8x128xf32, #tpu.memory_space<vmem>>) attributes {dimension_semantics = [#tpu.dimension_semantics<parallel>], iteration_bounds = array<i64: 1>, scalar_prefetch = 0 : i64, scratch_operands = 0 : i64, tpu.core_type = #tpu.core_type<tc>, window_params = [{transform_indices = @transform_0, window_bounds = array<i64: 8, 32>}, {pipeline_mode = #tpu.pipeline_mode<synchronous>, transform_indices = @transform_1, window_bounds = array<i64: 128, 32>}, {pipeline_mode = #tpu.pipeline_mode<synchronous>, transform_indices = @transform_2, window_bounds = array<i64: 1, 128>}, {transform_indices = @transform_3, window_bounds = array<i64: 8, 128>}]} {
    %c0 = arith.constant 0 : index
    %c0_0 = arith.constant 0 : index
    %0 = vector.load %arg1[%c0, %c0_0] : memref<8x32xf32, #tpu.memory_space<vmem>>, vector<8x32xf32>
    %c0_1 = arith.constant 0 : index
    %c0_2 = arith.constant 0 : index
    %1 = vector.load %arg2[%c0_1, %c0_2] : memref<128x32xf32, #tpu.memory_space<vmem>>, vector<128x32xf32>
    %cst = arith.constant dense<0.000000e+00> : vector<8x128xf32>
    %2 = tpu.matmul %0, %1, %cst {dimension_numbers = #tpu.dot_dimension_numbers<[1], [1], [0], [0], [0, 0, 1, 0], [], []>} : vector<8x32xf32>, vector<128x32xf32>, vector<8x128xf32> -> vector<8x128xf32>
    %c0_3 = arith.constant 0 : index
    %c0_4 = arith.constant 0 : index
    %3 = vector.load %arg3[%c0_3, %c0_4] : memref<1x128xf32, #tpu.memory_space<vmem>>, vector<1x128xf32>
    %4 = vector.broadcast %3 : vector<1x128xf32> to vector<8x128xf32>
    %5 = arith.addf %2, %4 : vector<8x128xf32>
    %c0_5 = arith.constant 0 : index
    %c0_6 = arith.constant 0 : index
    %6 = vector.load %arg4[%c0_5, %c0_6] : memref<8x128xf32, #tpu.memory_space<vmem>>, vector<8x128xf32>
    tpu.vector_store %arg4[%c0_5, %c0_6], %5 {strides = array<i32>} : memref<8x128xf32, #tpu.memory_space<vmem>>, vector<8x128xf32>,
    return
  }
  func.func @transform_0(%arg0: i32) -> (i32, i32) {
    %c0_i32 = arith.constant 0 : i32
    %c0_i32_0 = arith.constant 0 : i32
    return %arg0, %c0_i32 : i32, i32
  }
  func.func @transform_1(%arg0: i32) -> (i32, i32) {
    %c0_i32 = arith.constant 0 : i32
    %c0_i32_0 = arith.constant 0 : i32
    %c0_i32_1 = arith.constant 0 : i32
    return %c0_i32, %c0_i32_0 : i32, i32
  }
  func.func @transform_2(%arg0: i32) -> (i32, i32) {
    %c0_i32 = arith.constant 0 : i32
    %c0_i32_0 = arith.constant 0 : i32
    %c0_i32_1 = arith.constant 0 : i32
    return %c0_i32, %c0_i32_0 : i32, i32
  }
  func.func @transform_3(%arg0: i32) -> (i32, i32) {
    %c0_i32 = arith.constant 0 : i32
    %c0_i32_0 = arith.constant 0 : i32
    return %arg0, %c0_i32 : i32, i32
  }
}

</mosaic_0001>

<llo_original>
// kernel: simple_model_forward.1
$region0: #{simple_model_forward.1}
  #allocation0 [shape = 'u32[]', space=smem, size = 0x4, offset = 0x4, fixed_abs, tag = 'smem constant byte address 0x4 - core index']
  #allocation1 [shape = 'u32[144,128]{1,0:T(1,128)}', space=vmem, size = 0x12000, scoped, tag = 'internal scratch']
  %s0 = inlined_call_operand.vmem [shape: f32[8,32], index: 0, kind: input, shape index: {}]
  %s1 = inlined_call_operand.vmem [shape: f32[128,32], index: 1, kind: input, shape index: {}]
  %s2 = inlined_call_operand.vmem [shape: f32[1,128], index: 2, kind: input, shape index: {}]
  %s3 = inlined_call_operand.hbm [shape: f32[8,128], index: 3, kind: output, shape index: {}]
  %s4 = sld [smem:[#allocation0]]
  $region22: #{simple_model_forward.1} parent=0
    _
  %s6 = ssub.s32 1, %s4
  %s7 = scalar_select 0, %s6, %s4
  $region1: #{simple_model_forward.1} parent=0
    #allocation2 [shape = 'u8[4096]{0}', space=vmem, size = 0x1000, scoped, tag = 'output window, operand 0, single buffered']
    #allocation3 [shape = 's32[1]{0}', space=sflag, size = 0x4, scoped, tag = 'scoped memory for simple_model_forward.1']
    %8 = vsyncpa [#allocation3], 0
    // Predicated region
    $region2: #{simple_model_forward.1} parent=1 // pred_check
      _
    $region3: #{simple_model_forward.1} parent=1 // pred_check_branch
      %10 = sbr.rel (0) target = $region5
    $region4: #{simple_model_forward.1} parent=1 // pred_region
      _
    $region5: #{simple_model_forward.1} parent=1 // pred_fallthru
      _
    // Predicated region
    $region6: #{simple_model_forward.1} parent=1 // pred_check
      _
    $region7: #{simple_model_forward.1} parent=1 // pred_check_branch
      %12 = sbr.rel (0) target = $region9
    $region8: #{simple_model_forward.1} parent=1 // pred_region
      _
    $region9: #{simple_model_forward.1} parent=1 // pred_fallthru
      _
    // Predicated region
    $region10: #{simple_model_forward.1} parent=1 // pred_check
      _
    $region11: #{simple_model_forward.1} parent=1 // pred_check_branch
      %14 = sbr.rel (0) target = $region13
    $region12: #{simple_model_forward.1} parent=1 // pred_region
      _
    $region13: #{simple_model_forward.1} parent=1 // pred_fallthru
      _
    %v15 = vld [vmem:[%s0] sm:$0xff]
    %v16 = vld [vmem:[%s1] sm:$0xff]
    %v17 = vld [vmem:[%s1 + $0x8] sm:$0xff]
    %v18 = vld [vmem:[%s1 + $0x10] sm:$0xff]
    %v19 = vld [vmem:[%s1 + $0x18] sm:$0xff]
    %v20 = vld [vmem:[%s1 + $0x20] sm:$0xff]
    %v21 = vld [vmem:[%s1 + $0x28] sm:$0xff]
    %v22 = vld [vmem:[%s1 + $0x30] sm:$0xff]
    %v23 = vld [vmem:[%s1 + $0x38] sm:$0xff]
    %v24 = vld [vmem:[%s1 + $0x40] sm:$0xff]
    %v25 = vld [vmem:[%s1 + $0x48] sm:$0xff]
    %v26 = vld [vmem:[%s1 + $0x50] sm:$0xff]
    %v27 = vld [vmem:[%s1 + $0x58] sm:$0xff]
    %v28 = vld [vmem:[%s1 + $0x60] sm:$0xff]
    %v29 = vld [vmem:[%s1 + $0x68] sm:$0xff]
    %v30 = vld [vmem:[%s1 + $0x70] sm:$0xff]
    %v31 = vld [vmem:[%s1 + $0x78] sm:$0xff]
    %v32 = vld [vmem:[%s2] sm:$0x1]
    %v34 = vlaneseq
    %v35 = vshrl.u32 %v34, 7
    %v36 = vsub.s32 0, %v35
    %v37 = vrot.slane %v32, %v36
    %vm39 = vcmask 261120
    %v41 = vsel %vm39, %v15, 0
    %v44 = vsel %vm39, %v16, 0
    %v47 = vsel %vm39, %v17, 0
    %v50 = vsel %vm39, %v18, 0
    %v53 = vsel %vm39, %v19, 0
    %v56 = vsel %vm39, %v20, 0
    %v59 = vsel %vm39, %v21, 0
    %v62 = vsel %vm39, %v22, 0
    %v65 = vsel %vm39, %v23, 0
    %v68 = vsel %vm39, %v24, 0
    %v71 = vsel %vm39, %v25, 0
    %v74 = vsel %vm39, %v26, 0
    %v77 = vsel %vm39, %v27, 0
    %v80 = vsel %vm39, %v28, 0
    %v83 = vsel %vm39, %v29, 0
    %v86 = vsel %vm39, %v30, 0
    %v89 = vsel %vm39, %v31, 0
    %91 = vmatprep.subr.mxu0 0.0
    %92 = vmatpush1.xpose.msra.mxu0 %v44
    %93 = vmatprep.subr.mxu0 0.0
    %94 = vmatpush1.xpose.msra.mxu0 %v47
    %95 = vmatprep.subr.mxu0 0.0
    %96 = vmatpush1.xpose.msra.mxu0 %v50
    %97 = vmatprep.subr.mxu0 0.0
    %98 = vmatpush1.xpose.msra.mxu0 %v53
    %99 = vmatprep.subr.mxu0 0.0
    %100 = vmatpush1.xpose.msra.mxu0 %v56
    %101 = vmatprep.subr.mxu0 0.0
    %102 = vmatpush1.xpose.msra.mxu0 %v59
    %103 = vmatprep.subr.mxu0 0.0
    %104 = vmatpush1.xpose.msra.mxu0 %v62
    %105 = vmatprep.subr.mxu0 0.0
    %106 = vmatpush1.xpose.msra.mxu0 %v65
    %107 = vmatprep.subr.mxu0 0.0
    %108 = vmatpush1.xpose.msra.mxu0 %v68
    %109 = vmatprep.subr.mxu0 0.0
    %110 = vmatpush1.xpose.msra.mxu0 %v71
    %111 = vmatprep.subr.mxu0 0.0
    %112 = vmatpush1.xpose.msra.mxu0 %v74
    %113 = vmatprep.subr.mxu0 0.0
    %114 = vmatpush1.xpose.msra.mxu0 %v77
    %115 = vmatprep.subr.mxu0 0.0
    %116 = vmatpush1.xpose.msra.mxu0 %v80
    %117 = vmatprep.subr.mxu0 0.0
    %118 = vmatpush1.xpose.msra.mxu0 %v83
    %119 = vmatprep.subr.mxu0 0.0
    %120 = vmatpush1.xpose.msra.mxu0 %v86
    %121 = vmatprep.subr.mxu0 0.0
    %122 = vmatpush1.xpose.msra.mxu0 %v89
    %123 = vmatprep.subr.mxu0 0.0
    %124 = vmatpush1.xpose.msra.mxu0 0.0
    %125 = vmatprep.subr.mxu0 0.0
    %126 = vmatpush1.xpose.msra.mxu0 0.0
    %127 = vmatprep.subr.mxu0 0.0
    %128 = vmatpush1.xpose.msra.mxu0 0.0
    %129 = vmatprep.subr.mxu0 0.0
    %130 = vmatpush1.xpose.msra.mxu0 0.0
    %131 = vmatprep.subr.mxu0 0.0
    %132 = vmatpush1.xpose.msra.mxu0 0.0
    %133 = vmatprep.subr.mxu0 0.0
    %134 = vmatpush1.xpose.msra.mxu0 0.0
    %135 = vmatprep.subr.mxu0 0.0
    %136 = vmatpush1.xpose.msra.mxu0 0.0
    %137 = vmatprep.subr.mxu0 0.0
    %138 = vmatpush1.xpose.msra.mxu0 0.0
    %139 = vmatprep.subr.mxu0 0.0
    %140 = vmatpush1.xpose.msra.mxu0 0.0
    %141 = vmatprep.subr.mxu0 0.0
    %142 = vmatpush1.xpose.msra.mxu0 0.0
    %143 = vmatprep.subr.mxu0 0.0
    %144 = vmatpush1.xpose.msra.mxu0 0.0
    %145 = vmatprep.subr.mxu0 0.0
    %146 = vmatpush1.xpose.msra.mxu0 0.0
    %147 = vmatprep.subr.mxu0 0.0
    %148 = vmatpush1.xpose.msra.mxu0 0.0
    %149 = vmatprep.subr.mxu0 0.0
    %150 = vmatpush1.xpose.msra.mxu0 0.0
    %151 = vmatprep.subr.mxu0 0.0
    %152 = vmatpush1.xpose.msra.mxu0 0.0
    %153 = vmatprep.subr.mxu0 0.0
    %154 = vmatpush1.xpose.msra.mxu0 0.0
    %155 = vmatprep.mubr.f32.mxu0 0.0
    %156 = vmatmul.mubr.f32.gmra.mrb[0].mxu0 %v41
    %v157 = vpop.f32.mrb[0].mxu0
    %v158 = vadd.f32 %v37, %v157
    %v159 = vpop.f32.mrb[0].mxu0
    %160 = vdwg.mxu0
    %161 = vst [vmem:[#allocation2] sm:$0xff] %v158
    // Predicated region
    $region14: #{simple_model_forward.1} parent=1 // pred_check
      _
    $region15: #{simple_model_forward.1} parent=1 // pred_check_branch
      %163 = sbr.rel (0) target = $region17
    $region16: #{simple_model_forward.1} parent=1 // pred_region
      %s165 = ssub.s32 128, 128
      %166 = vsyncadd [#allocation3], %s165
      %s168 = sshll.u32 [#allocation2], 4
      %s169 = int_to_ptr.vmem [resolvable:$true] %s168
      %171 = dma.vmem_to_hbm [thread:$0]  %s169, 128, %s3, [#allocation3]
    $region17: #{simple_model_forward.1} parent=1 // pred_fallthru
      _
    // Predicated region
    $region18: #{simple_model_forward.1} parent=1 // pred_check
      _
    $region19: #{simple_model_forward.1} parent=1 // pred_check_branch
      %173 = sbr.rel (0) target = $region21
    $region20: #{simple_model_forward.1} parent=1 // pred_region
      %174 = dma.done [#allocation3], 128
    $region21: #{simple_model_forward.1} parent=1 // pred_fallthru
      _
    %175 = vsyncpa [#allocation3], 1

</llo_original>
